<compile_context>
chip_gen: v7x
topology: tpu7x:2x2x1
jax: 0.10.0
libtpu: 0.0.40
codegen_flags: <defaults>
</compile_context>

<pallas_src>
import jax
import jax.numpy as jnp
from jax import lax
from jax.experimental import pallas as pl
from jax.experimental.pallas import tpu as pltpu


def _round_up(x, m):
    return ((x + m - 1) // m) * m


# --------------------------------------------------------------------------
# Kernels
# --------------------------------------------------------------------------
def _img_pos_emb_kernel_resident(idx_ref, emb_ref, pos_ref, out_ref):
    # idx_ref: (TILE_L, 1) int32   -- class ids for this L tile
    # emb_ref: (K_PAD, D)          -- full (padded) embedding table, resident
    # pos_ref: (TILE_L, D)         -- precomputed positional slab tile
    # out_ref: (TILE_L, D)         -- output tile
    tile_l = idx_ref.shape[0]
    k_full = emb_ref.shape[0]

    # One-hot in (M, K) orientation so the MXU gets an untransposed feed and
    # the (L, D) result lands in natural lane layout.
    col = lax.broadcasted_iota(jnp.int32, (tile_l, k_full), 1)
    one_hot = (col == idx_ref[...]).astype(emb_ref.dtype)

    gathered = jnp.dot(one_hot, emb_ref[...], preferred_element_type=jnp.float32)
    out_ref[...] = (gathered + pos_ref[...].astype(jnp.float32)).astype(out_ref.dtype)


def _img_pos_emb_kernel_tiled(idx_ref, emb_ref, pos_ref, out_ref, acc_ref):
    # K-tiled fallback for tables that do not fit VMEM.
    # idx_ref: (TILE_L, 1) int32
    # emb_ref: (TILE_K, D)            -- K tile of the embedding table
    # pos_ref: (TILE_L, D)
    # out_ref: (TILE_L, D)            -- resident across the K axis
    # acc_ref: (TILE_L, D) f32 scratch
    k = pl.program_id(2)
    tile_l = idx_ref.shape[0]
    tile_k = emb_ref.shape[0]

    # k-invariant iota; shift the small (tile_l, 1) index column instead of
    # broadcast-adding k*tile_k over the whole (tile_l, tile_k) iota.
    col = lax.broadcasted_iota(jnp.int32, (tile_l, tile_k), 1)
    one_hot = (col == (idx_ref[...] - k * tile_k)).astype(emb_ref.dtype)
    part = jnp.dot(one_hot, emb_ref[...], preferred_element_type=jnp.float32)

    @pl.when(k == 0)
    def _():
        acc_ref[...] = part          # direct assign: no zero-fill + add

    @pl.when(k > 0)
    def _():
        acc_ref[...] += part

    @pl.when(k == pl.num_programs(2) - 1)
    def _():
        out_ref[...] = (acc_ref[...]
                        + pos_ref[...].astype(jnp.float32)).astype(out_ref.dtype)


# --------------------------------------------------------------------------
# Wrapper
# --------------------------------------------------------------------------
def image_positional_embeddings(index, emb_w, height_w, width_w, *,
                                tile_l=256, tile_k=1024,
                                vmem_budget_frac=0.6,
                                force_tiled=False):
    B, L = index.shape
    num_embed, D = emb_w.shape
    H, W = height_w.shape[0], width_w.shape[0]
    assert L <= H * W

    out_dtype = emb_w.dtype
    emb_isz = jnp.dtype(emb_w.dtype).itemsize
    out_isz = jnp.dtype(out_dtype).itemsize

    # Positional slab, computed once in the wrapper: (H,1,D)+(1,W,D) -> (L, D).
    pos = (height_w[:, None, :] + width_w[None, :, :]).reshape(H * W, D)[:L]
    pos = pos.astype(emb_w.dtype)

    # --- tile sizing: 128-aligned (lane-dense one-hot, MXU-aligned M/K) -----
    tile_l = max(128, _round_up(min(tile_l, max(L, 1)), 128))
    tile_l = min(tile_l, _round_up(L, 128))
    # Keep >= 2 parallel grid steps when possible (v7x has 2 TCs per chip).
    if B == 1 and tile_l >= _round_up(L, 128) and _round_up(L, 128) >= 256:
        tile_l = 128
    l_pad = _round_up(L, tile_l)
    k_pad_full = _round_up(num_embed, 128)

    # --- VMEM budgeting ------------------------------------------------------
    try:
        vmem_cap = int(pltpu.get_tpu_info().vmem_capacity_bytes)
    except Exception:
        vmem_cap = 64 * 1024 * 1024          # conservative (v7x per-TC VMEM)
    vmem_budget = int(vmem_cap * vmem_budget_frac)

    def _resident_bytes(k_rows):
        return (2 * k_rows * D * emb_isz        # emb table (double-buffer alloc;
                                                #  constant index => single DMA)
                + 2 * tile_l * D * emb_isz      # pos tiles
                + 2 * tile_l * 128 * 4          # idx tiles (lane-padded to 128)
                + 2 * tile_l * D * out_isz      # out tiles
                + tile_l * k_rows * emb_isz     # materialized one-hot
                + tile_l * D * 4)               # f32 matmul result

    def _tiled_bytes(tk):
        return (2 * tk * D * emb_isz
                + 2 * tile_l * D * emb_isz
                + 2 * tile_l * 128 * 4
                + 2 * tile_l * D * out_isz
                + tile_l * tk * emb_isz
                + 2 * tile_l * D * 4)           # matmul result + acc scratch

    resident = (not force_tiled) and (_resident_bytes(k_pad_full) <= vmem_budget)

    if resident:
        k_pad = k_pad_full
        needed = _resident_bytes(k_pad)
    else:
        tile_k = min(_round_up(tile_k, 128), k_pad_full)
        while tile_k > 128 and _tiled_bytes(tile_k) > vmem_budget:
            tile_k = max(128, _round_up(tile_k // 2, 128))
        k_pad = _round_up(num_embed, tile_k)
        needed = _tiled_bytes(tile_k)

    vmem_limit = int(min(vmem_cap * 3 // 4,
                         max(needed + needed // 4 + (4 << 20), 32 << 20)))
    vmem_limit = max(vmem_limit, needed + (2 << 20))

    # --- pad inputs ----------------------------------------------------------
    idx_p = index.astype(jnp.int32)
    if l_pad != L:
        idx_p = jnp.pad(idx_p, ((0, 0), (0, l_pad - L)))
        pos = jnp.pad(pos, ((0, l_pad - L), (0, 0)))
    emb_p = emb_w if k_pad == num_embed else jnp.pad(
        emb_w, ((0, k_pad - num_embed), (0, 0)))
    idx_p = idx_p[..., None]                     # (B, l_pad, 1)

    # --- cost hint for the XLA scheduler ------------------------------------
    cost = pl.CostEstimate(
        flops=2 * B * l_pad * k_pad * D,
        transcendentals=0,
        bytes_accessed=(k_pad * D * emb_isz          # table (read ~once)
                        + l_pad * D * emb_isz        # pos slab
                        + B * l_pad * 4              # indices
                        + B * l_pad * D * out_isz),  # output
    )

    if resident:
        out = pl.pallas_call(
            _img_pos_emb_kernel_resident,
            out_shape=jax.ShapeDtypeStruct((B, l_pad, D), out_dtype),
            grid_spec=pltpu.PrefetchScalarGridSpec(
                num_scalar_prefetch=0,
                grid=(l_pad // tile_l, B),
                in_specs=[
                    pl.BlockSpec((None, tile_l, 1), lambda m, b: (b, m, 0)),
                    # Constant block index: table DMA'd once, then resident.
                    pl.BlockSpec((k_pad, D), lambda m, b: (0, 0)),
                    # Constant across b: pos tile fetched once per L-tile.
                    pl.BlockSpec((tile_l, D), lambda m, b: (m, 0)),
                ],
                out_specs=pl.BlockSpec((None, tile_l, D), lambda m, b: (b, m, 0)),
            ),
            compiler_params=pltpu.CompilerParams(
                dimension_semantics=("parallel", "parallel"),
                vmem_limit_bytes=vmem_limit,
            ),
            cost_estimate=cost,
        )(idx_p, emb_p, pos)
    else:
        out = pl.pallas_call(
            _img_pos_emb_kernel_tiled,
            out_shape=jax.ShapeDtypeStruct((B, l_pad, D), out_dtype),
            grid_spec=pltpu.PrefetchScalarGridSpec(
                num_scalar_prefetch=0,
                grid=(l_pad // tile_l, B, k_pad // tile_k),
                in_specs=[
                    pl.BlockSpec((None, tile_l, 1), lambda m, b, k: (b, m, 0)),
                    pl.BlockSpec((tile_k, D), lambda m, b, k: (k, 0)),
                    pl.BlockSpec((tile_l, D), lambda m, b, k: (m, 0)),
                ],
                out_specs=pl.BlockSpec((None, tile_l, D),
                                       lambda m, b, k: (b, m, 0)),
                scratch_shapes=[pltpu.VMEM((tile_l, D), jnp.float32)],
            ),
            compiler_params=pltpu.CompilerParams(
                dimension_semantics=("parallel", "parallel", "arbitrary"),
                vmem_limit_bytes=vmem_limit,
            ),
            cost_estimate=cost,
        )(idx_p, emb_p, pos)

    return out[:, :L, :]


# --------------------------------------------------------------------------
# Pure-JAX reference (mirrors the PyTorch forward)
# --------------------------------------------------------------------------
def _reference(index, emb_w, height_w, width_w):
    H, W = height_w.shape[0], width_w.shape[0]
    emb = jnp.take(emb_w, index, axis=0)                        # (B, L, D)
    pos = height_w[:, None, :] + width_w[None, :, :]            # (H, W, D)
    pos = pos.reshape(1, H * W, -1)[:, : index.shape[1], :]     # (1, L, D)
    return emb + pos


if __name__ == "__main__":
    # Module config (small, consistent with the forward).
    num_embed = 32
    height = 4
    width = 4
    embed_dim = 32
    batch = 2
    seq_len = height * width  # 16

    key = jax.random.PRNGKey(0)
    k_emb, k_h, k_w, k_idx = jax.random.split(key, 4)

    # nn.Embedding default init ~ N(0, 1).
    emb_w = jax.random.normal(k_emb, (num_embed, embed_dim), dtype=jnp.float32)
    height_w = jax.random.normal(k_h, (height, embed_dim), dtype=jnp.float32)
    width_w = jax.random.normal(k_w, (width, embed_dim), dtype=jnp.float32)

    index = jax.random.randint(k_idx, (batch, seq_len), 0, num_embed,
                               dtype=jnp.int32)

    # --- resident-table path (common case) ----------------------------------
    out = image_positional_embeddings(index, emb_w, height_w, width_w)
    out = jax.block_until_ready(out)
    ref = _reference(index, emb_w, height_w, width_w)
    assert out.shape == (batch, seq_len, embed_dim)
    assert jnp.allclose(out, ref, atol=1e-5, rtol=1e-5)

    # --- partial sequence (L < H*W), as allowed by the module ---------------
    short = seq_len - 6
    out_s = image_positional_embeddings(index[:, :short], emb_w, height_w, width_w)
    out_s = jax.block_until_ready(out_s)
    ref_s = _reference(index[:, :short], emb_w, height_w, width_w)
    assert out_s.shape == (batch, short, embed_dim)
    assert jnp.allclose(out_s, ref_s, atol=1e-5, rtol=1e-5)

    # --- K-tiled fallback path (large-vocab case, forced here) --------------
    big_vocab = 512
    emb_big = jax.random.normal(k_emb, (big_vocab, embed_dim), dtype=jnp.float32)
    idx_big = jax.random.randint(k_idx, (batch, seq_len), 0, big_vocab,
                                 dtype=jnp.int32)
    out_t = image_positional_embeddings(idx_big, emb_big, height_w, width_w,
                                        tile_k=128, force_tiled=True)
    out_t = jax.block_until_ready(out_t)
    ref_t = _reference(idx_big, emb_big, height_w, width_w)
    assert out_t.shape == (batch, seq_len, embed_dim)
    assert jnp.allclose(out_t, ref_t, atol=1e-5, rtol=1e-5)

    print("KERNEL_OK")
</pallas_src>

<mosaic_0001>
module attributes {stable_mosaic.version = 11 : i64} {
  func.func @_img_pos_emb_kernel_resident(%arg0: i32, %arg1: i32, %arg2: memref<1x128x1xi32, #tpu.memory_space<vmem>>, %arg3: memref<128x32xf32, #tpu.memory_space<vmem>>, %arg4: memref<128x32xf32, #tpu.memory_space<vmem>>, %arg5: memref<1x128x32xf32, #tpu.memory_space<vmem>>) attributes {dimension_semantics = [#tpu.dimension_semantics<parallel>, #tpu.dimension_semantics<parallel>], iteration_bounds = array<i64: 1, 2>, scalar_prefetch = 0 : i64, scratch_operands = 0 : i64, tpu.core_type = #tpu.core_type<tc>, window_params = [{transform_indices = @transform_0, window_bounds = array<i64: 1, 128, 1>}, {pipeline_mode = #tpu.pipeline_mode<synchronous>, transform_indices = @transform_1, window_bounds = array<i64: 128, 32>}, {transform_indices = @transform_2, window_bounds = array<i64: 128, 32>}, {transform_indices = @transform_3, window_bounds = array<i64: 1, 128, 32>}]} {
    %0 = tpu.iota {dimensions = array<i32: 1>} : vector<128x128xi32>
    %c0 = arith.constant 0 : index
    %c0_0 = arith.constant 0 : index
    %c0_1 = arith.constant 0 : index
    %1 = vector.load %arg2[%c0, %c0_0, %c0_1] : memref<1x128x1xi32, #tpu.memory_space<vmem>>, vector<1x128x1xi32>
    %2 = vector.shape_cast %1 : vector<1x128x1xi32> to vector<128x1xi32>
    %3 = vector.broadcast %2 : vector<128x1xi32> to vector<128x128xi32>
    %4 = arith.cmpi eq, %0, %3 : vector<128x128xi32>
    %5 = arith.extui %4 : vector<128x128xi1> to vector<128x128xi32>
    %6 = arith.sitofp %5 : vector<128x128xi32> to vector<128x128xf32>
    %c0_2 = arith.constant 0 : index
    %c0_3 = arith.constant 0 : index
    %7 = vector.load %arg3[%c0_2, %c0_3] : memref<128x32xf32, #tpu.memory_space<vmem>>, vector<128x32xf32>
    %cst = arith.constant dense<0.000000e+00> : vector<128x32xf32>
    %8 = tpu.matmul %6, %7, %cst {dimension_numbers = #tpu.dot_dimension_numbers<[1], [0], [0], [1], [0, 0, 1, 1], [], []>} : vector<128x128xf32>, vector<128x32xf32>, vector<128x32xf32> -> vector<128x32xf32>
    %c0_4 = arith.constant 0 : index
    %c0_5 = arith.constant 0 : index
    %9 = vector.load %arg4[%c0_4, %c0_5] : memref<128x32xf32, #tpu.memory_space<vmem>>, vector<128x32xf32>
    %10 = arith.addf %8, %9 : vector<128x32xf32>
    %c0_6 = arith.constant 0 : index
    %c0_7 = arith.constant 0 : index
    %c0_8 = arith.constant 0 : index
    %11 = vector.load %arg5[%c0_6, %c0_7, %c0_8] : memref<1x128x32xf32, #tpu.memory_space<vmem>>, vector<1x128x32xf32>
    %12 = vector.shape_cast %11 : vector<1x128x32xf32> to vector<128x32xf32>
    %13 = vector.shape_cast %10 : vector<128x32xf32> to vector<1x128x32xf32>
    tpu.vector_store %arg5[%c0_6, %c0_7, %c0_8], %13 {strides = array<i32>} : memref<1x128x32xf32, #tpu.memory_space<vmem>>, vector<1x128x32xf32>,
    return
  }
  func.func @transform_0(%arg0: i32, %arg1: i32) -> (i32, i32, i32) {
    %c0_i32 = arith.constant 0 : i32
    %c0_i32_0 = arith.constant 0 : i32
    return %arg1, %arg0, %c0_i32 : i32, i32, i32
  }
  func.func @transform_1(%arg0: i32, %arg1: i32) -> (i32, i32) {
    %c0_i32 = arith.constant 0 : i32
    %c0_i32_0 = arith.constant 0 : i32
    %c0_i32_1 = arith.constant 0 : i32
    return %c0_i32, %c0_i32_0 : i32, i32
  }
  func.func @transform_2(%arg0: i32, %arg1: i32) -> (i32, i32) {
    %c0_i32 = arith.constant 0 : i32
    %c0_i32_0 = arith.constant 0 : i32
    return %arg0, %c0_i32 : i32, i32
  }
  func.func @transform_3(%arg0: i32, %arg1: i32) -> (i32, i32, i32) {
    %c0_i32 = arith.constant 0 : i32
    %c0_i32_0 = arith.constant 0 : i32
    return %arg1, %arg0, %c0_i32 : i32, i32, i32
  }
}

</mosaic_0001>

<llo_original>
// kernel: tpu_custom_call.1
$region0: #{tpu_custom_call.1}
  #allocation0 [shape = 'u32[]', space=smem, size = 0x4, offset = 0x4, fixed_abs, tag = 'smem constant byte address 0x4 - core index']
  #allocation1 [shape = 'u32[144,128]{1,0:T(1,128)}', space=vmem, size = 0x12000, scoped, tag = 'internal scratch']
  %s0 = inlined_call_operand.vmem [shape: s32[2,128,1], index: 0, kind: input, shape index: {}]
  %s1 = inlined_call_operand.vmem [shape: f32[128,32], index: 1, kind: input, shape index: {}]
  %s2 = inlined_call_operand.vmem [shape: f32[128,32], index: 2, kind: input, shape index: {}]
  %s3 = inlined_call_operand.vmem [shape: f32[2,128,32], index: 3, kind: output, shape index: {}]
  %s4 = sld [smem:[#allocation0]]
  $region45: #{tpu_custom_call.1} parent=0
    _
  %s6 = ssub.s32 1, %s4
  %s7 = scalar_select 0, %s6, %s4
  loop: start=0, step=1, limit=4
  $region2: #{tpu_custom_call.1} parent=0 // loop_pre_header
    _
  $region3: #{tpu_custom_call.1} parent=0 // loop_header
    %s9 = sphi 0, %s13
    %p10 = scmp.ge.s32.totalorder %s9, 4
    %s16 = sphi 0, %s28
    %s17 = sphi 0, %s24
    %s18 = sphi 0, %s16
    %s19 = sphi 0, %s17
    %s20 = sphi 0, %s18
    %s21 = sphi 0, %s19
    %s33 = sphi 0, %s35
    %s36 = sphi 0, %s33
    %s37 = sphi 0, %s36
    %s53 = sphi 0, %s37
    %s57 = sphi 0, %s57
    %s59 = sphi 0, %s57
    %s60 = sphi 0, %s59
    %s74 = sphi 0, %s60
    %s80 = sphi 0, %s82
    %s83 = sphi 0, %s80
    %s84 = sphi 0, %s83
    %s100 = sphi 0, %s84
    %s108 = sphi 0, %s110
    %s111 = sphi 0, %s108
    %s112 = sphi 0, %s111
    %s128 = sphi 0, %s112
  $region4: #{tpu_custom_call.1} parent=0 // loop_header_branch
    %12 = sbr.rel (%p10) target = $region8
  $region5: #{tpu_custom_call.1} parent=0 // loop_body
    %s14 = ssub.s32 %s9, 1
    %s15 = ssub.s32 %s9, 2
    %s22 = sadd.s32 1, %s17
    %p23 = scmp.ge.s32.totalorder %s22, 2
    %s24 = scalar_select %p23, 0, %s22
    %s25 = sadd.s32 1, %s16
    %s26 = scalar_select %p23, %s25, %s16
    %p27 = scmp.ge.s32.totalorder %s26, 1
    %s28 = scalar_select %p27, 0, %s26
    %s29 = ssub.s32 %s17, %s24
    %s30 = ssub.s32 %s16, %s28
    %s31 = sor.u32 %s29, %s30
    %p32 = scmp.eq.s32.totalorder %s31, 0
    %s34 = sadd.s32 %s33, 1
    %s35 = scalar_select %p32, %s33, %s34
    %p38 = pneg %p32
    %p39 = scmp.eq.s32.totalorder %s9, 1
    %p40 = por %p38, %p39
    %p41 = scmp.ne.s32.totalorder %s33, %s36
    %p42 = scmp.eq.s32.totalorder %s9, 0
    %p43 = por %p41, %p42
    %p44 = scmp.ne.s32.totalorder %s33, %s36
    %p45 = scmp.eq.s32.totalorder %s14, 1
    %p46 = por %p44, %p45
    %p47 = scmp.ne.s32.totalorder %s36, %s37
    %p48 = scmp.eq.s32.totalorder %s14, 0
    %p49 = por %p47, %p48
    %p50 = scmp.ne.s32.totalorder %s36, %s37
    %p51 = scmp.eq.s32.totalorder %s15, 1
    %p52 = por %p50, %p51
    %p54 = scmp.ne.s32.totalorder %s37, %s53
    %p55 = scmp.eq.s32.totalorder %s15, 0
    %p56 = por %p54, %p55
    %s58 = sadd.s32 %s57, 1
    %p61 = scmp.eq.s32.totalorder %s9, 1
    %p62 = scmp.ne.s32.totalorder %s57, %s59
    %p63 = scmp.eq.s32.totalorder %s9, 0
    %p64 = por %p62, %p63
    %p65 = scmp.ne.s32.totalorder %s57, %s59
    %p66 = scmp.eq.s32.totalorder %s14, 1
    %p67 = por %p65, %p66
    %p68 = scmp.ne.s32.totalorder %s59, %s60
    %p69 = scmp.eq.s32.totalorder %s14, 0
    %p70 = por %p68, %p69
    %p71 = scmp.ne.s32.totalorder %s59, %s60
    %p72 = scmp.eq.s32.totalorder %s15, 1
    %p73 = por %p71, %p72
    %p75 = scmp.ne.s32.totalorder %s60, %s74
    %p76 = scmp.eq.s32.totalorder %s15, 0
    %p77 = por %p75, %p76
    %s78 = ssub.s32 %s16, %s28
    %p79 = scmp.eq.s32.totalorder %s78, 0
    %s81 = sadd.s32 %s80, 1
    %s82 = scalar_select %p79, %s80, %s81
    %p85 = pneg %p79
    %p86 = scmp.eq.s32.totalorder %s9, 1
    %p87 = por %p85, %p86
    %p88 = scmp.ne.s32.totalorder %s80, %s83
    %p89 = scmp.eq.s32.totalorder %s9, 0
    %p90 = por %p88, %p89
    %p91 = scmp.ne.s32.totalorder %s80, %s83
    %p92 = scmp.eq.s32.totalorder %s14, 1
    %p93 = por %p91, %p92
    %p94 = scmp.ne.s32.totalorder %s83, %s84
    %p95 = scmp.eq.s32.totalorder %s14, 0
    %p96 = por %p94, %p95
    %p97 = scmp.ne.s32.totalorder %s83, %s84
    %p98 = scmp.eq.s32.totalorder %s15, 1
    %p99 = por %p97, %p98
    %p101 = scmp.ne.s32.totalorder %s84, %s100
    %p102 = scmp.eq.s32.totalorder %s15, 0
    %p103 = por %p101, %p102
    %s104 = ssub.s32 %s17, %s24
    %s105 = ssub.s32 %s16, %s28
    %s106 = sor.u32 %s104, %s105
    %p107 = scmp.eq.s32.totalorder %s106, 0
    %s109 = sadd.s32 %s108, 1
    %s110 = scalar_select %p107, %s108, %s109
    %p113 = pneg %p107
    %p114 = scmp.eq.s32.totalorder %s9, 1
    %p115 = por %p113, %p114
    %p116 = scmp.ne.s32.totalorder %s108, %s111
    %p117 = scmp.eq.s32.totalorder %s9, 0
    %p118 = por %p116, %p117
    %p119 = scmp.ne.s32.totalorder %s108, %s111
    %p120 = scmp.eq.s32.totalorder %s14, 1
    %p121 = por %p119, %p120
    %p122 = scmp.ne.s32.totalorder %s111, %s112
    %p123 = scmp.eq.s32.totalorder %s14, 0
    %p124 = por %p122, %p123
    %p125 = scmp.ne.s32.totalorder %s111, %s112
    %p126 = scmp.eq.s32.totalorder %s15, 1
    %p127 = por %p125, %p126
    %p129 = scmp.ne.s32.totalorder %s112, %s128
    %p130 = scmp.eq.s32.totalorder %s15, 0
    %p131 = por %p129, %p130
    %p132 = scmp.le.s32.totalorder 1, %s9
    %p133 = scmp.lt.s32.totalorder %s9, 3
    %p134 = pnand %p132, %p133
    %p135 = pneg %p134
    // Predicated region
    $region9: #{tpu_custom_call.1} parent=5 // pred_check
      _
    $region10: #{tpu_custom_call.1} parent=5 // pred_check_branch
      %137 = sbr.rel (%p134) target = $region12
    $region11: #{tpu_custom_call.1} parent=5 // pred_region
      %s138 = ssub.s32 %s9, 1
      // Predicated region
      $region13: #{tpu_custom_call.1} parent=11 // pred_check
        %p139 = pneg %p70
      $region14: #{tpu_custom_call.1} parent=11 // pred_check_branch
        %141 = sbr.rel (%p139) target = $region16
      $region15: #{tpu_custom_call.1} parent=11 // pred_region
        _
      $region16: #{tpu_custom_call.1} parent=11 // pred_fallthru
        _
      // Predicated region
      $region17: #{tpu_custom_call.1} parent=11 // pred_check
        %p142 = pneg %p96
      $region18: #{tpu_custom_call.1} parent=11 // pred_check_branch
        %144 = sbr.rel (%p142) target = $region20
      $region19: #{tpu_custom_call.1} parent=11 // pred_region
        %s145 = smul.u32 16, %s18
        %p146 = scmp.lt.s32.totalorder %s145, 15
        %s147 = scalar_select %p146, %s145, 15
        %s148 = smul.addr %s147, 8
        %s149 = scalar_lea.vmem %s2, %s148
        %s150 = smul.u32 16, %s18
      $region20: #{tpu_custom_call.1} parent=11 // pred_fallthru
        _
    $region12: #{tpu_custom_call.1} parent=5 // pred_fallthru
      _
    %p151 = scmp.lt.s32.totalorder %s9, 2
    // Predicated region
    $region21: #{tpu_custom_call.1} parent=5 // pred_check
      %p152 = pneg %p151
    $region22: #{tpu_custom_call.1} parent=5 // pred_check_branch
      %154 = sbr.rel (%p152) target = $region24
    $region23: #{tpu_custom_call.1} parent=5 // pred_region
      // Predicated region
      $region25: #{tpu_custom_call.1} parent=23 // pred_check
        %p155 = pneg %p43
      $region26: #{tpu_custom_call.1} parent=23 // pred_check_branch
        %157 = sbr.rel (%p155) target = $region28
      $region27: #{tpu_custom_call.1} parent=23 // pred_region
        %s158 = smul.u32 16, %s16
        %p159 = scmp.lt.s32.totalorder %s17, 1
        %s160 = scalar_select %p159, %s17, 1
        %p161 = scmp.lt.s32.totalorder %s158, 15
        %s162 = scalar_select %p161, %s158, 15
        %s163 = smul.addr %s160, 16
        %s164 = sadd.s32 %s162, %s163
        %s165 = smul.addr %s164, 8
        %s166 = scalar_lea.vmem %s0, %s165
        %s167 = smul.u32 16, %s16
      $region28: #{tpu_custom_call.1} parent=23 // pred_fallthru
        _
    $region24: #{tpu_custom_call.1} parent=5 // pred_fallthru
      _
    %p168 = scmp.le.s32.totalorder 1, %s9
    %p169 = scmp.lt.s32.totalorder %s9, 3
    %p170 = pnand %p168, %p169
    %p171 = pneg %p170
    // Predicated region
    $region29: #{tpu_custom_call.1} parent=5 // pred_check
      _
    $region30: #{tpu_custom_call.1} parent=5 // pred_check_branch
      %173 = sbr.rel (%p170) target = $region32
    $region31: #{tpu_custom_call.1} parent=5 // pred_region
      %s174 = ssub.s32 %s9, 1
      %s175 = smul.u32 16, %s18
      %p176 = scmp.lt.s32.totalorder %s19, 1
      %s177 = scalar_select %p176, %s19, 1
      %p178 = scmp.lt.s32.totalorder %s175, 15
      %s179 = scalar_select %p178, %s175, 15
      %s180 = smul.addr %s177, 16
      %s181 = sadd.s32 %s179, %s180
      %s182 = smul.addr %s181, 8
      %s183 = scalar_lea.vmem %s0, %s182
      %p184 = pneg %p49
      %p185 = pneg %p46
      %p186 = pneg %p70
      %p187 = pneg %p67
      %s188 = smul.u32 16, %s18
      %p189 = scmp.lt.s32.totalorder %s188, 15
      %s190 = scalar_select %p189, %s188, 15
      %s191 = smul.addr %s190, 8
      %s192 = scalar_lea.vmem %s2, %s191
      %p193 = pneg %p96
      %p194 = pneg %p93
      %p195 = pneg %p124
      %p196 = pneg %p121
      %s197 = smul.u32 16, %s18
      %p198 = scmp.lt.s32.totalorder %s19, 1
      %s199 = scalar_select %p198, %s19, 1
      %p200 = scmp.lt.s32.totalorder %s197, 15
      %s201 = scalar_select %p200, %s197, 15
      %s202 = smul.addr %s199, 16
      %s203 = sadd.s32 %s201, %s202
      %s204 = smul.addr %s203, 8
      %s205 = scalar_lea.vmem %s3, %s204
      %s206 = smul.u32 16, %s18
      %p207 = scmp.lt.s32.totalorder %s19, 1
      %s208 = scalar_select %p207, %s19, 1
      %p209 = scmp.lt.s32.totalorder %s206, 15
      %s210 = scalar_select %p209, %s206, 15
      %s211 = smul.addr %s208, 16
      %s212 = sadd.s32 %s210, %s211
      %s213 = smul.addr %s212, 8
      %s214 = scalar_lea.vmem %s0, %s213
      %s215 = smul.u32 16, %s18
      %s216 = smul.u32 16, %s18
      %p217 = scmp.lt.s32.totalorder %s216, 15
      %s218 = scalar_select %p217, %s216, 15
      %s219 = smul.addr %s218, 8
      %s220 = scalar_lea.vmem %s2, %s219
      %s221 = smul.u32 16, %s18
      %s222 = smul.u32 16, %s18
      %p223 = scmp.lt.s32.totalorder %s19, 1
      %s224 = scalar_select %p223, %s19, 1
      %p225 = scmp.lt.s32.totalorder %s222, 15
      %s226 = scalar_select %p225, %s222, 15
      %s227 = smul.addr %s224, 16
      %s228 = sadd.s32 %s226, %s227
      %s229 = smul.addr %s228, 8
      %s230 = scalar_lea.vmem %s3, %s229
      %s231 = smul.u32 16, %s18
      %v232 = vlaneseq
      %v233 = vand.u32 %v232, 127
      %v234 = vld [vmem:[%s214] sm:$0xff]
      %v235 = vld [vmem:[%s214 + $0x8] sm:$0xff]
      %v236 = vld [vmem:[%s214 + $0x10] sm:$0xff]
      %v237 = vld [vmem:[%s214 + $0x18] sm:$0xff]
      %v238 = vld [vmem:[%s214 + $0x20] sm:$0xff]
      %v239 = vld [vmem:[%s214 + $0x28] sm:$0xff]
      %v240 = vld [vmem:[%s214 + $0x30] sm:$0xff]
      %v241 = vld [vmem:[%s214 + $0x38] sm:$0xff]
      %v242 = vld [vmem:[%s214 + $0x40] sm:$0xff]
      %v243 = vld [vmem:[%s214 + $0x48] sm:$0xff]
      %v244 = vld [vmem:[%s214 + $0x50] sm:$0xff]
      %v245 = vld [vmem:[%s214 + $0x58] sm:$0xff]
      %v246 = vld [vmem:[%s214 + $0x60] sm:$0xff]
      %v247 = vld [vmem:[%s214 + $0x68] sm:$0xff]
      %v248 = vld [vmem:[%s214 + $0x70] sm:$0xff]
      %v249 = vld [vmem:[%s214 + $0x78] sm:$0xff]
      %250 = vset.pattern.permute.xlu0 0
      %251 = vperm.xlu0 %250, %v234
      %v252 = vpop.permute.xlu0 %251
      %253 = vset.pattern.permute.xlu0 0
      %254 = vperm.xlu0 %253, %v235
      %v255 = vpop.permute.xlu0 %254
      %256 = vset.pattern.permute.xlu0 0
      %257 = vperm.xlu0 %256, %v236
      %v258 = vpop.permute.xlu0 %257
      %259 = vset.pattern.permute.xlu0 0
      %260 = vperm.xlu0 %259, %v237
      %v261 = vpop.permute.xlu0 %260
      %262 = vset.pattern.permute.xlu0 0
      %263 = vperm.xlu0 %262, %v238
      %v264 = vpop.permute.xlu0 %263
      %265 = vset.pattern.permute.xlu0 0
      %266 = vperm.xlu0 %265, %v239
      %v267 = vpop.permute.xlu0 %266
      %268 = vset.pattern.permute.xlu0 0
      %269 = vperm.xlu0 %268, %v240
      %v270 = vpop.permute.xlu0 %269
      %271 = vset.pattern.permute.xlu0 0
      %272 = vperm.xlu0 %271, %v241
      %v273 = vpop.permute.xlu0 %272
      %274 = vset.pattern.permute.xlu0 0
      %275 = vperm.xlu0 %274, %v242
      %v276 = vpop.permute.xlu0 %275
      %277 = vset.pattern.permute.xlu0 0
      %278 = vperm.xlu0 %277, %v243
      %v279 = vpop.permute.xlu0 %278
      %280 = vset.pattern.permute.xlu0 0
      %281 = vperm.xlu0 %280, %v244
      %v282 = vpop.permute.xlu0 %281
      %283 = vset.pattern.permute.xlu0 0
      %284 = vperm.xlu0 %283, %v245
      %v285 = vpop.permute.xlu0 %284
      %286 = vset.pattern.permute.xlu0 0
      %287 = vperm.xlu0 %286, %v246
      %v288 = vpop.permute.xlu0 %287
      %289 = vset.pattern.permute.xlu0 0
      %290 = vperm.xlu0 %289, %v247
      %v291 = vpop.permute.xlu0 %290
      %292 = vset.pattern.permute.xlu0 0
      %293 = vperm.xlu0 %292, %v248
      %v294 = vpop.permute.xlu0 %293
      %295 = vset.pattern.permute.xlu0 0
      %296 = vperm.xlu0 %295, %v249
      %v297 = vpop.permute.xlu0 %296
      %vm298 = vcmp.eq.s32.totalorder %v233, %v252
      %vm299 = vcmp.eq.s32.totalorder %v233, %v255
      %vm300 = vcmp.eq.s32.totalorder %v233, %v258
      %vm301 = vcmp.eq.s32.totalorder %v233, %v261
      %vm302 = vcmp.eq.s32.totalorder %v233, %v264
      %vm303 = vcmp.eq.s32.totalorder %v233, %v267
      %vm304 = vcmp.eq.s32.totalorder %v233, %v270
      %vm305 = vcmp.eq.s32.totalorder %v233, %v273
      %vm306 = vcmp.eq.s32.totalorder %v233, %v276
      %vm307 = vcmp.eq.s32.totalorder %v233, %v279
      %vm308 = vcmp.eq.s32.totalorder %v233, %v282
      %vm309 = vcmp.eq.s32.totalorder %v233, %v285
      %vm310 = vcmp.eq.s32.totalorder %v233, %v288
      %vm311 = vcmp.eq.s32.totalorder %v233, %v291
      %vm312 = vcmp.eq.s32.totalorder %v233, %v294
      %vm313 = vcmp.eq.s32.totalorder %v233, %v297
      %v314 = vsel %vm298, 1, 0
      %v315 = vsel %vm299, 1, 0
      %v316 = vsel %vm300, 1, 0
      %v317 = vsel %vm301, 1, 0
      %v318 = vsel %vm302, 1, 0
      %v319 = vsel %vm303, 1, 0
      %v320 = vsel %vm304, 1, 0
      %v321 = vsel %vm305, 1, 0
      %v322 = vsel %vm306, 1, 0
      %v323 = vsel %vm307, 1, 0
      %v324 = vsel %vm308, 1, 0
      %v325 = vsel %vm309, 1, 0
      %v326 = vsel %vm310, 1, 0
      %v327 = vsel %vm311, 1, 0
      %v328 = vsel %vm312, 1, 0
      %v329 = vsel %vm313, 1, 0
      %v330 = vcvt.s32.f32 %v314
      %v331 = vcvt.s32.f32 %v315
      %v332 = vcvt.s32.f32 %v316
      %v333 = vcvt.s32.f32 %v317
      %v334 = vcvt.s32.f32 %v318
      %v335 = vcvt.s32.f32 %v319
      %v336 = vcvt.s32.f32 %v320
      %v337 = vcvt.s32.f32 %v321
      %v338 = vcvt.s32.f32 %v322
      %v339 = vcvt.s32.f32 %v323
      %v340 = vcvt.s32.f32 %v324
      %v341 = vcvt.s32.f32 %v325
      %v342 = vcvt.s32.f32 %v326
      %v343 = vcvt.s32.f32 %v327
      %v344 = vcvt.s32.f32 %v328
      %v345 = vcvt.s32.f32 %v329
      %v346 = vld [vmem:[%s1] sm:$0xff]
      %v347 = vld [vmem:[%s1 + $0x8] sm:$0xff]
      %v348 = vld [vmem:[%s1 + $0x10] sm:$0xff]
      %v349 = vld [vmem:[%s1 + $0x18] sm:$0xff]
      %v350 = vld [vmem:[%s1 + $0x20] sm:$0xff]
      %v351 = vld [vmem:[%s1 + $0x28] sm:$0xff]
      %v352 = vld [vmem:[%s1 + $0x30] sm:$0xff]
      %v353 = vld [vmem:[%s1 + $0x38] sm:$0xff]
      %v354 = vld [vmem:[%s1 + $0x40] sm:$0xff]
      %v355 = vld [vmem:[%s1 + $0x48] sm:$0xff]
      %v356 = vld [vmem:[%s1 + $0x50] sm:$0xff]
      %v357 = vld [vmem:[%s1 + $0x58] sm:$0xff]
      %v358 = vld [vmem:[%s1 + $0x60] sm:$0xff]
      %v359 = vld [vmem:[%s1 + $0x68] sm:$0xff]
      %v360 = vld [vmem:[%s1 + $0x70] sm:$0xff]
      %v361 = vld [vmem:[%s1 + $0x78] sm:$0xff]
      %v362 = vld [vmem:[%s220] sm:$0xff]
      %v363 = vld [vmem:[%s220 + $0x8] sm:$0xff]
      %v364 = vld [vmem:[%s220 + $0x10] sm:$0xff]
      %v365 = vld [vmem:[%s220 + $0x18] sm:$0xff]
      %v366 = vld [vmem:[%s220 + $0x20] sm:$0xff]
      %v367 = vld [vmem:[%s220 + $0x28] sm:$0xff]
      %v368 = vld [vmem:[%s220 + $0x30] sm:$0xff]
      %v369 = vld [vmem:[%s220 + $0x38] sm:$0xff]
      %v370 = vld [vmem:[%s220 + $0x40] sm:$0xff]
      %v371 = vld [vmem:[%s220 + $0x48] sm:$0xff]
      %v372 = vld [vmem:[%s220 + $0x50] sm:$0xff]
      %v373 = vld [vmem:[%s220 + $0x58] sm:$0xff]
      %v374 = vld [vmem:[%s220 + $0x60] sm:$0xff]
      %v375 = vld [vmem:[%s220 + $0x68] sm:$0xff]
      %v376 = vld [vmem:[%s220 + $0x70] sm:$0xff]
      %v377 = vld [vmem:[%s220 + $0x78] sm:$0xff]
      %378 = vmatprep.subr.mxu0 0.0
      %379 = vmatpush1.msra.mxu0 %v346
      %380 = vmatprep.subr.mxu0 0.0
      %381 = vmatpush1.msra.mxu0 %v347
      %382 = vmatprep.subr.mxu0 0.0
      %383 = vmatpush1.msra.mxu0 %v348
      %384 = vmatprep.subr.mxu0 0.0
      %385 = vmatpush1.msra.mxu0 %v349
      %386 = vmatprep.subr.mxu0 0.0
      %387 = vmatpush1.msra.mxu0 %v350
      %388 = vmatprep.subr.mxu0 0.0
      %389 = vmatpush1.msra.mxu0 %v351
      %390 = vmatprep.subr.mxu0 0.0
      %391 = vmatpush1.msra.mxu0 %v352
      %392 = vmatprep.subr.mxu0 0.0
      %393 = vmatpush1.msra.mxu0 %v353
      %394 = vmatprep.subr.mxu0 0.0
      %395 = vmatpush1.msra.mxu0 %v354
      %396 = vmatprep.subr.mxu0 0.0
      %397 = vmatpush1.msra.mxu0 %v355
      %398 = vmatprep.subr.mxu0 0.0
      %399 = vmatpush1.msra.mxu0 %v356
      %400 = vmatprep.subr.mxu0 0.0
      %401 = vmatpush1.msra.mxu0 %v357
      %402 = vmatprep.subr.mxu0 0.0
      %403 = vmatpush1.msra.mxu0 %v358
      %404 = vmatprep.subr.mxu0 0.0
      %405 = vmatpush1.msra.mxu0 %v359
      %406 = vmatprep.subr.mxu0 0.0
      %407 = vmatpush1.msra.mxu0 %v360
      %408 = vmatprep.subr.mxu0 0.0
      %409 = vmatpush1.msra.mxu0 %v361
      %410 = vmatprep.subr.mxu0 0.0
      %411 = vmatpush1.msra.mxu0 0.0
      %412 = vmatprep.subr.mxu0 0.0
      %413 = vmatpush1.msra.mxu0 0.0
      %414 = vmatprep.subr.mxu0 0.0
      %415 = vmatpush1.msra.mxu0 0.0
      %416 = vmatprep.subr.mxu0 0.0
      %417 = vmatpush1.msra.mxu0 0.0
      %418 = vmatprep.subr.mxu0 0.0
      %419 = vmatpush1.msra.mxu0 0.0
      %420 = vmatprep.subr.mxu0 0.0
      %421 = vmatpush1.msra.mxu0 0.0
      %422 = vmatprep.subr.mxu0 0.0
      %423 = vmatpush1.msra.mxu0 0.0
      %424 = vmatprep.subr.mxu0 0.0
      %425 = vmatpush1.msra.mxu0 0.0
      %426 = vmatprep.subr.mxu0 0.0
      %427 = vmatpush1.msra.mxu0 0.0
      %428 = vmatprep.subr.mxu0 0.0
      %429 = vmatpush1.msra.mxu0 0.0
      %430 = vmatprep.subr.mxu0 0.0
      %431 = vmatpush1.msra.mxu0 0.0
      %432 = vmatprep.subr.mxu0 0.0
      %433 = vmatpush1.msra.mxu0 0.0
      %434 = vmatprep.subr.mxu0 0.0
      %435 = vmatpush1.msra.mxu0 0.0
      %436 = vmatprep.subr.mxu0 0.0
      %437 = vmatpush1.msra.mxu0 0.0
      %438 = vmatprep.subr.mxu0 0.0
      %439 = vmatpush1.msra.mxu0 0.0
      %440 = vmatprep.subr.mxu0 0.0
      %441 = vmatpush1.msra.mxu0 0.0
      %442 = vmatprep.mubr.f32.mxu0 0.0
      %443 = vmatmul.mubr.f32.gmra.mrb[0].mxu0 %v330
      %v444 = vpop.f32.mrb[0].mxu0
      %v445 = vadd.f32 %v362, %v444
      %v446 = vpop.f32.mrb[0].mxu0
      %447 = vmatprep.mubr.f32.mxu0 0.0
      %448 = vmatmul.mubr.f32.gmra.mrb[0].mxu0 %v331
      %v449 = vpop.f32.mrb[0].mxu0
      %v450 = vadd.f32 %v363, %v449
      %v451 = vpop.f32.mrb[0].mxu0
      %452 = vmatprep.mubr.f32.mxu0 0.0
      %453 = vmatmul.mubr.f32.gmra.mrb[0].mxu0 %v332
      %v454 = vpop.f32.mrb[0].mxu0
      %v455 = vadd.f32 %v364, %v454
      %v456 = vpop.f32.mrb[0].mxu0
      %457 = vmatprep.mubr.f32.mxu0 0.0
      %458 = vmatmul.mubr.f32.gmra.mrb[0].mxu0 %v333
      %v459 = vpop.f32.mrb[0].mxu0
      %v460 = vadd.f32 %v365, %v459
      %v461 = vpop.f32.mrb[0].mxu0
      %462 = vmatprep.mubr.f32.mxu0 0.0
      %463 = vmatmul.mubr.f32.gmra.mrb[0].mxu0 %v334
      %v464 = vpop.f32.mrb[0].mxu0
      %v465 = vadd.f32 %v366, %v464
      %v466 = vpop.f32.mrb[0].mxu0
      %467 = vmatprep.mubr.f32.mxu0 0.0
      %468 = vmatmul.mubr.f32.gmra.mrb[0].mxu0 %v335
      %v469 = vpop.f32.mrb[0].mxu0
      %v470 = vadd.f32 %v367, %v469
      %v471 = vpop.f32.mrb[0].mxu0
      %472 = vmatprep.mubr.f32.mxu0 0.0
      %473 = vmatmul.mubr.f32.gmra.mrb[0].mxu0 %v336
      %v474 = vpop.f32.mrb[0].mxu0
      %v475 = vadd.f32 %v368, %v474
      %v476 = vpop.f32.mrb[0].mxu0
      %477 = vmatprep.mubr.f32.mxu0 0.0
      %478 = vmatmul.mubr.f32.gmra.mrb[0].mxu0 %v337
      %v479 = vpop.f32.mrb[0].mxu0
      %v480 = vadd.f32 %v369, %v479
      %v481 = vpop.f32.mrb[0].mxu0
      %482 = vmatprep.mubr.f32.mxu0 0.0
      %483 = vmatmul.mubr.f32.gmra.mrb[0].mxu0 %v338
      %v484 = vpop.f32.mrb[0].mxu0
      %v485 = vadd.f32 %v370, %v484
      %v486 = vpop.f32.mrb[0].mxu0
      %487 = vmatprep.mubr.f32.mxu0 0.0
      %488 = vmatmul.mubr.f32.gmra.mrb[0].mxu0 %v339
      %v489 = vpop.f32.mrb[0].mxu0
      %v490 = vadd.f32 %v371, %v489
      %v491 = vpop.f32.mrb[0].mxu0
      %492 = vmatprep.mubr.f32.mxu0 0.0
      %493 = vmatmul.mubr.f32.gmra.mrb[0].mxu0 %v340
      %v494 = vpop.f32.mrb[0].mxu0
      %v495 = vadd.f32 %v372, %v494
      %v496 = vpop.f32.mrb[0].mxu0
      %497 = vmatprep.mubr.f32.mxu0 0.0
      %498 = vmatmul.mubr.f32.gmra.mrb[0].mxu0 %v341
      %v499 = vpop.f32.mrb[0].mxu0
      %v500 = vadd.f32 %v373, %v499
      %v501 = vpop.f32.mrb[0].mxu0
      %502 = vmatprep.mubr.f32.mxu0 0.0
      %503 = vmatmul.mubr.f32.gmra.mrb[0].mxu0 %v342
      %v504 = vpop.f32.mrb[0].mxu0
      %v505 = vadd.f32 %v374, %v504
      %v506 = vpop.f32.mrb[0].mxu0
      %507 = vmatprep.mubr.f32.mxu0 0.0
      %508 = vmatmul.mubr.f32.gmra.mrb[0].mxu0 %v343
      %v509 = vpop.f32.mrb[0].mxu0
      %v510 = vadd.f32 %v375, %v509
      %v511 = vpop.f32.mrb[0].mxu0
      %512 = vmatprep.mubr.f32.mxu0 0.0
      %513 = vmatmul.mubr.f32.gmra.mrb[0].mxu0 %v344
      %v514 = vpop.f32.mrb[0].mxu0
      %v515 = vadd.f32 %v376, %v514
      %v516 = vpop.f32.mrb[0].mxu0
      %517 = vmatprep.mubr.f32.mxu0 0.0
      %518 = vmatmul.mubr.f32.gmra.mrb[0].mxu0 %v345
      %v519 = vpop.f32.mrb[0].mxu0
      %v520 = vadd.f32 %v377, %v519
      %v521 = vpop.f32.mrb[0].mxu0
      %522 = vdwg.mxu0
      %vm523 = vcmask 261120
      %524 = vst.msk [vmem:[%s230] sm:$0xff] %vm523, %v445
      %525 = vst.msk [vmem:[%s230 + $0x8] sm:$0xff] %vm523, %v450
      %526 = vst.msk [vmem:[%s230 + $0x10] sm:$0xff] %vm523, %v455
      %527 = vst.msk [vmem:[%s230 + $0x18] sm:$0xff] %vm523, %v460
      %528 = vst.msk [vmem:[%s230 + $0x20] sm:$0xff] %vm523, %v465
      %529 = vst.msk [vmem:[%s230 + $0x28] sm:$0xff] %vm523, %v470
      %530 = vst.msk [vmem:[%s230 + $0x30] sm:$0xff] %vm523, %v475
      %531 = vst.msk [vmem:[%s230 + $0x38] sm:$0xff] %vm523, %v480
      %532 = vst.msk [vmem:[%s230 + $0x40] sm:$0xff] %vm523, %v485
      %533 = vst.msk [vmem:[%s230 + $0x48] sm:$0xff] %vm523, %v490
      %534 = vst.msk [vmem:[%s230 + $0x50] sm:$0xff] %vm523, %v495
      %535 = vst.msk [vmem:[%s230 + $0x58] sm:$0xff] %vm523, %v500
      %536 = vst.msk [vmem:[%s230 + $0x60] sm:$0xff] %vm523, %v505
      %537 = vst.msk [vmem:[%s230 + $0x68] sm:$0xff] %vm523, %v510
      %538 = vst.msk [vmem:[%s230 + $0x70] sm:$0xff] %vm523, %v515
      %539 = vst.msk [vmem:[%s230 + $0x78] sm:$0xff] %vm523, %v520
      %s540 = smul.u32 16, %s18
      %p541 = scmp.lt.s32.totalorder %s19, 1
      %s542 = scalar_select %p541, %s19, 1
      %p543 = scmp.lt.s32.totalorder %s540, 15
      %s544 = scalar_select %p543, %s540, 15
      %s545 = smul.addr %s542, 16
      %s546 = sadd.s32 %s544, %s545
      %s547 = smul.addr %s546, 8
      %s548 = scalar_lea.vmem %s3, %s547
      // Predicated region
      $region33: #{tpu_custom_call.1} parent=31 // pred_check
        %p549 = pneg %p121
      $region34: #{tpu_custom_call.1} parent=31 // pred_check_branch
        %551 = sbr.rel (%p549) target = $region36
      $region35: #{tpu_custom_call.1} parent=31 // pred_region
        %s552 = smul.u32 16, %s18
      $region36: #{tpu_custom_call.1} parent=31 // pred_fallthru
        _
    $region32: #{tpu_custom_call.1} parent=5 // pred_fallthru
      _
    %p553 = scmp.le.s32.totalorder 2, %s9
    // Predicated region
    $region37: #{tpu_custom_call.1} parent=5 // pred_check
      %p554 = pneg %p553
    $region38: #{tpu_custom_call.1} parent=5 // pred_check_branch
      %556 = sbr.rel (%p554) target = $region40
    $region39: #{tpu_custom_call.1} parent=5 // pred_region
      %s557 = ssub.s32 %s9, 2
      // Predicated region
      $region41: #{tpu_custom_call.1} parent=39 // pred_check
        %p558 = pneg %p127
      $region42: #{tpu_custom_call.1} parent=39 // pred_check_branch
        %560 = sbr.rel (%p558) target = $region44
      $region43: #{tpu_custom_call.1} parent=39 // pred_region
        %s561 = smul.u32 16, %s20
        %p562 = scmp.lt.s32.totalorder %s21, 1
        %s563 = scalar_select %p562, %s21, 1
        %p564 = scmp.lt.s32.totalorder %s561, 15
        %s565 = scalar_select %p564, %s561, 15
        %s566 = smul.addr %s563, 16
        %s567 = sadd.s32 %s565, %s566
        %s568 = smul.addr %s567, 8
        %s569 = scalar_lea.vmem %s3, %s568
      $region44: #{tpu_custom_call.1} parent=39 // pred_fallthru
        _
    $region40: #{tpu_custom_call.1} parent=5 // pred_fallthru
      _
  $region6: #{tpu_custom_call.1} parent=0 // loop_footer
    %s13 = sadd.s32 1, %s9
  $region7: #{tpu_custom_call.1} parent=0 // loop_footer_branch
    %8 = sbr.rel target = $region3
  $region8: #{tpu_custom_call.1} parent=0 // loop_exit
    _

</llo_original>
